<compile_context>
chip_gen: v5e
topology: v5e:2x2
jax: 0.10.0
libtpu: 0.0.40
codegen_flags: <defaults>
</compile_context>

<pallas_src>
import jax
import jax.numpy as jnp
from jax.experimental import pallas as pl
from jax.experimental.pallas import tpu as pltpu

_BIG = 1e30  # "diagonal" value for zero-padded rows (keeps them out of the row hinge)


def _maxmargin_tile_kernel(im_ref, s_ref, drow_ref, dcol_ref, out_ref, acc_ref):
    j = pl.program_id(1)

    # MXU: contract the last dims of both operands -> scores tile = im_blk @ s_blk.T
    # without materializing a transposed copy of s.
    scores = jax.lax.dot_general(
        im_ref[...], s_ref[...],
        dimension_numbers=(((1,), (1,)), ((), ())),
        preferred_element_type=jnp.float32,
    )                                            # (t_i, t_j) f32

    d1 = drow_ref[...]                           # (t_i, 1): diag - margin, by row
    d2 = dcol_ref[...]                           # (1, t_j): diag - margin, by col
    # Margin is already folded into d1/d2 -> only the two relu passes remain.
    cost = jnp.maximum(scores - d1, 0.0) + jnp.maximum(scores - d2, 0.0)

    # Lane-parallel partial sums: the sublane reduce is mostly VPU adds across
    # vregs; the cross-lane reduce + vector->SMEM crossing is deferred to the
    # last j step (once per row block).
    col_sums = jnp.sum(cost, axis=0, keepdims=True)          # (1, t_j)

    @pl.when(j == 0)
    def _():
        acc_ref[...] = jnp.zeros_like(acc_ref)

    acc_ref[...] += col_sums

    @pl.when(j == pl.num_programs(1) - 1)
    def _():
        out_ref[0, 0] = jnp.sum(acc_ref[...])


def _round_up(x: int, m: int) -> int:
    return ((x + m - 1) // m) * m


def _tpu_params():
    """Generation-aware tiling / VMEM budget."""
    kind = ""
    try:
        kind = jax.devices()[0].device_kind.lower()
    except Exception:  # pragma: no cover - defensive
        pass
    if "v7" in kind:
        # 64 MiB physical VMEM, 2 TensorCores: smaller scoped budget and make
        # sure the "parallel" i axis gets >= 2 blocks so both TCs are busy.
        return dict(align=256, vmem_limit=40 << 20, max_ti=1024, max_tj=256, cores=2)
    if "v6" in kind:
        return dict(align=256, vmem_limit=96 << 20, max_ti=2048, max_tj=512, cores=1)
    if "v5" in kind:
        return dict(align=128, vmem_limit=96 << 20, max_ti=1024, max_tj=512, cores=1)
    # Unknown / older generation: stay conservative (default scoped VMEM limit).
    return dict(align=128, vmem_limit=None, max_ti=512, max_tj=256, cores=2)


def _pick_tiles(batch: int, embed_dim: int, itemsize: int, params):
    """Padded batch + asymmetric (t_i, t_j) tile sizes that divide it."""
    align = params["align"]
    b_pad = _round_up(batch, 128)

    def best_tile(cap: int, prefer: int) -> int:
        cap = max(128, min(cap, b_pad))
        for step in dict.fromkeys((prefer, 128)):     # prefer MXU-wide multiples
            t = (cap // step) * step
            while t >= step:
                if b_pad % t == 0:
                    return t
                t -= step
        return 128                                     # b_pad is a multiple of 128

    t_j = best_tile(params["max_tj"], align)
    cap_i = params["max_ti"]
    if params["cores"] > 1 and b_pad >= 2 * 128:
        cap_i = min(cap_i, b_pad // 2)                 # grid_i >= 2 -> both TCs used
    t_i = best_tile(cap_i, align)

    budget = params["vmem_limit"]
    budget = int(0.6 * budget) if budget else 12 * 1024 * 1024

    def vmem_est(ti, tj):
        return (2 * (ti + tj) * embed_dim * itemsize   # double-buffered input blocks
                + 4 * ti * tj * 4                      # scores / hinge f32 temporaries
                + 2 * (ti * 128 + 8 * tj) * 4)         # padded diag row/col blocks

    while vmem_est(t_i, t_j) > budget and t_i > 128:
        t_i = best_tile(t_i - 128, align)
    while vmem_est(t_i, t_j) > budget and t_j > 128:
        t_j = best_tile(t_j - 128, align)
    return b_pad, t_i, t_j


def maxmargin_coot(im, s, margin: float = 0.1, *, compute_dtype=None,
                   tile_i=None, tile_j=None):
    """JAX/Pallas equivalent of MaxMargin_coot.forward(im, s)."""
    assert im.ndim == 2 and s.ndim == 2 and im.shape == s.shape
    if compute_dtype is not None:
        # Optional reduced-precision MXU path; diag below is computed from the
        # same rounded operands so the analytic corrections stay consistent.
        im = im.astype(compute_dtype)
        s = s.astype(compute_dtype)
    batch, embed_dim = im.shape
    itemsize = jnp.dtype(im.dtype).itemsize

    params = _tpu_params()
    b_pad, t_i, t_j = _pick_tiles(batch, embed_dim, itemsize, params)
    if tile_i is not None:
        t_i = int(tile_i)
    if tile_j is not None:
        t_j = int(tile_j)
    assert b_pad % t_i == 0 and b_pad % t_j == 0, (b_pad, t_i, t_j)
    grid_i, grid_j = b_pad // t_i, b_pad // t_j
    pad = b_pad - batch

    # Score-matrix diagonal (f32), margin folded in.
    diag = jnp.sum(im.astype(jnp.float32) * s.astype(jnp.float32),
                   axis=1, keepdims=True)                      # (B, 1)
    d_valid = diag - jnp.float32(margin)                       # (B, 1)

    if pad:
        im_k = jnp.pad(im, ((0, pad), (0, 0)))
        s_k = jnp.pad(s, ((0, pad), (0, 0)))
        d_row = jnp.concatenate(
            [d_valid, jnp.full((pad, 1), _BIG, jnp.float32)], axis=0)   # (Bp, 1)
    else:
        im_k, s_k, d_row = im, s, d_valid
    d_col = d_row.T                                            # (1, Bp)

    cp_kwargs = dict(dimension_semantics=("parallel", "arbitrary"))
    if params["vmem_limit"] is not None:
        cp_kwargs["vmem_limit_bytes"] = params["vmem_limit"]

    flops = 2 * b_pad * b_pad * embed_dim + 6 * b_pad * b_pad
    bytes_accessed = (itemsize * embed_dim * b_pad * (1 + grid_i)   # im once, s per row block
                      + 4 * 2 * b_pad * (grid_i + 1) + 4 * grid_i)
    cost_est = pl.CostEstimate(flops=flops, transcendentals=0,
                               bytes_accessed=bytes_accessed)

    partials = pl.pallas_call(
        _maxmargin_tile_kernel,
        out_shape=jax.ShapeDtypeStruct((grid_i, 1), jnp.float32),
        grid=(grid_i, grid_j),
        in_specs=[
            pl.BlockSpec((t_i, embed_dim), lambda i, j: (i, 0)),   # im row block (j-invariant)
            pl.BlockSpec((t_j, embed_dim), lambda i, j: (j, 0)),   # s  col block (streamed)
            pl.BlockSpec((t_i, 1), lambda i, j: (i, 0)),           # diag-margin rows
            pl.BlockSpec((1, t_j), lambda i, j: (0, j)),           # diag-margin cols
        ],
        out_specs=pl.BlockSpec((1, 1), lambda i, j: (i, 0),
                               memory_space=pltpu.SMEM),
        scratch_shapes=[pltpu.VMEM((1, t_j), jnp.float32)],
        compiler_params=pltpu.CompilerParams(**cp_kwargs),
        cost_estimate=cost_est,
    )(im_k, s_k, d_row, d_col)

    total = jnp.sum(partials)

    # Un-masked diagonal entries contribute relu(scores[k,k] - diag[k] + margin)
    # to both hinge branches (scores[k,k] == diag[k] up to reduction order).
    diag_corr = 2.0 * jnp.sum(jnp.maximum(diag - d_valid, 0.0))
    # Zero-padded columns add relu(margin - diag[i]) to the row hinge of every
    # valid row i (and symmetrically padded rows / valid columns): exact removal.
    pad_corr = 2.0 * pad * jnp.sum(jnp.maximum(-d_valid, 0.0))

    return (total - diag_corr - pad_corr) / jnp.float32(batch * batch)


def _reference(im, s, margin=0.1):
    scores = im.astype(jnp.float32) @ s.astype(jnp.float32).T
    diag = jnp.diag(scores)[:, None]
    eye = jnp.eye(scores.shape[0], dtype=bool)
    cost_s = jnp.maximum(margin + scores - diag, 0.0)
    cost_im = jnp.maximum(margin + scores - diag.T, 0.0)
    cost_s = jnp.where(eye, 0.0, cost_s)
    cost_im = jnp.where(eye, 0.0, cost_im)
    return (cost_s.sum() + cost_im.sum()) / (im.shape[0] * s.shape[0])


if __name__ == "__main__":
    key = jax.random.PRNGKey(0)
    k1, k2, k3, k4, k5, k6 = jax.random.split(key, 6)

    # Small shape consistent with the module (batch, embed_dim); exercises the
    # pad-to-128 path with a (1, 1) grid.
    batch, embed_dim = 8, 32
    im = jax.random.normal(k1, (batch, embed_dim), dtype=jnp.float32)
    s = jax.random.normal(k2, (batch, embed_dim), dtype=jnp.float32)
    loss = maxmargin_coot(im, s, margin=0.1)
    jax.block_until_ready(loss)
    ref = _reference(im, s, margin=0.1)
    assert jnp.allclose(loss, ref, rtol=1e-4, atol=1e-4), (loss, ref)

    # Multi-tile grid (2, 2): exercises the j-accumulation + per-row-block
    # partials path, no padding.
    batch2, embed_dim2 = 256, 64
    im2 = jax.random.normal(k3, (batch2, embed_dim2), dtype=jnp.float32)
    s2 = jax.random.normal(k4, (batch2, embed_dim2), dtype=jnp.float32)
    loss2 = maxmargin_coot(im2, s2, margin=0.1, tile_i=128, tile_j=128)
    jax.block_until_ready(loss2)
    ref2 = _reference(im2, s2, margin=0.1)
    assert jnp.allclose(loss2, ref2, rtol=1e-4, atol=1e-4), (loss2, ref2)

    # Awkward batch (no 128 divisor): pad + analytic correction combined with
    # a multi-tile grid.
    batch3, embed_dim3 = 200, 48
    im3 = jax.random.normal(k5, (batch3, embed_dim3), dtype=jnp.float32)
    s3 = jax.random.normal(k6, (batch3, embed_dim3), dtype=jnp.float32)
    loss3 = maxmargin_coot(im3, s3, margin=0.1, tile_i=128, tile_j=128)
    jax.block_until_ready(loss3)
    ref3 = _reference(im3, s3, margin=0.1)
    assert jnp.allclose(loss3, ref3, rtol=1e-4, atol=1e-4), (loss3, ref3)

    print("KERNEL_OK")
</pallas_src>

<mosaic_0001>
module attributes {stable_mosaic.version = 11 : i64} {
  func.func @_maxmargin_tile_kernel(%arg0: i32, %arg1: i32, %arg2: memref<128x32xf32, #tpu.memory_space<vmem>>, %arg3: memref<128x32xf32, #tpu.memory_space<vmem>>, %arg4: memref<128x1xf32, #tpu.memory_space<vmem>>, %arg5: memref<1x128xf32, #tpu.memory_space<vmem>>, %arg6: memref<1x1xf32, #tpu.memory_space<smem>>, %arg7: memref<1x128xf32, #tpu.memory_space<vmem>>) attributes {dimension_semantics = [#tpu.dimension_semantics<parallel>, #tpu.dimension_semantics<arbitrary>], iteration_bounds = array<i64: 1, 1>, scalar_prefetch = 0 : i64, scratch_operands = 1 : i64, tpu.core_type = #tpu.core_type<tc>, window_params = [{transform_indices = @transform_0, window_bounds = array<i64: 128, 32>}, {transform_indices = @transform_1, window_bounds = array<i64: 128, 32>}, {transform_indices = @transform_2, window_bounds = array<i64: 128, 1>}, {transform_indices = @transform_3, window_bounds = array<i64: 1, 128>}, {transform_indices = @transform_4, window_bounds = array<i64: 1, 1>}]} {
    %c0 = arith.constant 0 : index
    %c0_0 = arith.constant 0 : index
    %0 = vector.load %arg2[%c0, %c0_0] : memref<128x32xf32, #tpu.memory_space<vmem>>, vector<128x32xf32>
    %c0_1 = arith.constant 0 : index
    %c0_2 = arith.constant 0 : index
    %1 = vector.load %arg3[%c0_1, %c0_2] : memref<128x32xf32, #tpu.memory_space<vmem>>, vector<128x32xf32>
    %cst = arith.constant dense<0.000000e+00> : vector<128x128xf32>
    %2 = tpu.matmul %0, %1, %cst {dimension_numbers = #tpu.dot_dimension_numbers<[1], [1], [0], [0], [0, 0, 1, 0], [], []>} : vector<128x32xf32>, vector<128x32xf32>, vector<128x128xf32> -> vector<128x128xf32>
    %c0_3 = arith.constant 0 : index
    %c0_4 = arith.constant 0 : index
    %3 = vector.load %arg4[%c0_3, %c0_4] : memref<128x1xf32, #tpu.memory_space<vmem>>, vector<128x1xf32>
    %c0_5 = arith.constant 0 : index
    %c0_6 = arith.constant 0 : index
    %4 = vector.load %arg5[%c0_5, %c0_6] : memref<1x128xf32, #tpu.memory_space<vmem>>, vector<1x128xf32>
    %5 = vector.broadcast %3 : vector<128x1xf32> to vector<128x128xf32>
    %6 = arith.subf %2, %5 : vector<128x128xf32>
    %cst_7 = arith.constant 0.000000e+00 : f32
    %7 = vector.broadcast %cst_7 : f32 to vector<128x128xf32>
    %8 = arith.maximumf %6, %7 : vector<128x128xf32>
    %9 = vector.broadcast %4 : vector<1x128xf32> to vector<128x128xf32>
    %10 = arith.subf %2, %9 : vector<128x128xf32>
    %cst_8 = arith.constant 0.000000e+00 : f32
    %11 = vector.broadcast %cst_8 : f32 to vector<128x128xf32>
    %12 = arith.maximumf %10, %11 : vector<128x128xf32>
    %13 = arith.addf %8, %12 : vector<128x128xf32>
    %cst_9 = arith.constant dense<0.000000e+00> : vector<128xf32>
    %14 = vector.multi_reduction <add>, %13, %cst_9 [0] : vector<128x128xf32> to vector<128xf32>
    %15 = vector.shape_cast %14 : vector<128xf32> to vector<1x128xf32>
    %c0_i32 = arith.constant 0 : i32
    %16 = arith.cmpi eq, %arg1, %c0_i32 : i32
    %17 = arith.extui %16 : i1 to i32
    %c0_i32_10 = arith.constant 0 : i32
    %18 = arith.cmpi ne, %17, %c0_i32_10 : i32
    scf.if %18 {
      %cst_17 = arith.constant 0.000000e+00 : f32
      %25 = vector.broadcast %cst_17 : f32 to vector<1x128xf32>
      %c0_18 = arith.constant 0 : index
      %c0_19 = arith.constant 0 : index
      %26 = vector.load %arg7[%c0_18, %c0_19] : memref<1x128xf32, #tpu.memory_space<vmem>>, vector<1x128xf32>
      tpu.vector_store %arg7[%c0_18, %c0_19], %25 {strides = array<i32>} : memref<1x128xf32, #tpu.memory_space<vmem>>, vector<1x128xf32>,
    } else {
    }
    %c0_11 = arith.constant 0 : index
    %c0_12 = arith.constant 0 : index
    %19 = vector.load %arg7[%c0_11, %c0_12] : memref<1x128xf32, #tpu.memory_space<vmem>>, vector<1x128xf32>
    %20 = arith.addf %19, %15 : vector<1x128xf32>
    %c0_13 = arith.constant 0 : index
    %c0_14 = arith.constant 0 : index
    %21 = vector.load %arg7[%c0_13, %c0_14] : memref<1x128xf32, #tpu.memory_space<vmem>>, vector<1x128xf32>
    tpu.vector_store %arg7[%c0_13, %c0_14], %20 {strides = array<i32>} : memref<1x128xf32, #tpu.memory_space<vmem>>, vector<1x128xf32>,
    %c0_i32_15 = arith.constant 0 : i32
    %22 = arith.cmpi eq, %arg1, %c0_i32_15 : i32
    %23 = arith.extui %22 : i1 to i32
    %c0_i32_16 = arith.constant 0 : i32
    %24 = arith.cmpi ne, %23, %c0_i32_16 : i32
    scf.if %24 {
      %c0_17 = arith.constant 0 : index
      %c0_18 = arith.constant 0 : index
      %25 = vector.load %arg7[%c0_17, %c0_18] : memref<1x128xf32, #tpu.memory_space<vmem>>, vector<1x128xf32>
      %26 = vector.shape_cast %25 : vector<1x128xf32> to vector<1x1x128xf32>
      %cst_19 = arith.constant dense<0.000000e+00> : vector<1xf32>
      %27 = vector.multi_reduction <add>, %26, %cst_19 [1, 2] : vector<1x1x128xf32> to vector<1xf32>
      %28 = vector.shape_cast %27 : vector<1xf32> to vector<1x1x1xf32>
      %29 = vector.extract %28[0, 0, 0] : f32 from vector<1x1x1xf32>
      %c0_20 = arith.constant 0 : index
      %c0_21 = arith.constant 0 : index
      %30 = memref.load %arg6[%c0_20, %c0_21] : memref<1x1xf32, #tpu.memory_space<smem>>
      memref.store %29, %arg6[%c0_20, %c0_21] : memref<1x1xf32, #tpu.memory_space<smem>>
    } else {
    }
    return
  }
  func.func @transform_0(%arg0: i32, %arg1: i32) -> (i32, i32) {
    %c0_i32 = arith.constant 0 : i32
    %c0_i32_0 = arith.constant 0 : i32
    return %arg0, %c0_i32 : i32, i32
  }
  func.func @transform_1(%arg0: i32, %arg1: i32) -> (i32, i32) {
    %c0_i32 = arith.constant 0 : i32
    %c0_i32_0 = arith.constant 0 : i32
    return %arg1, %c0_i32 : i32, i32
  }
  func.func @transform_2(%arg0: i32, %arg1: i32) -> (i32, i32) {
    %c0_i32 = arith.constant 0 : i32
    %c0_i32_0 = arith.constant 0 : i32
    return %arg0, %c0_i32 : i32, i32
  }
  func.func @transform_3(%arg0: i32, %arg1: i32) -> (i32, i32) {
    %c0_i32 = arith.constant 0 : i32
    %c0_i32_0 = arith.constant 0 : i32
    return %c0_i32, %arg1 : i32, i32
  }
  func.func @transform_4(%arg0: i32, %arg1: i32) -> (i32, i32) {
    %c0_i32 = arith.constant 0 : i32
    %c0_i32_0 = arith.constant 0 : i32
    return %arg0, %c0_i32 : i32, i32
  }
}

</mosaic_0001>

<llo_original>
// kernel: tpu_custom_call.1
$region0: #{tpu_custom_call.1}
  #allocation0 [shape = 'u32[]', space=smem, size = 0x4, offset = 0x4, fixed_abs, tag = 'smem constant byte address 0x4 - core index']
  #allocation1 [shape = 'u32[72,128]{1,0:T(1,128)}', space=vmem, size = 0x9000, scoped, tag = 'internal scratch']
  #allocation2 [shape = 'f32[1,128]{1,0:T(1,128)}', space=vmem, size = 0x200, scoped, tag = 'scratch operand']
  %s0 = inlined_call_operand.vmem [shape: f32[128,32], index: 0, kind: input, shape index: {}]
  %s1 = inlined_call_operand.vmem [shape: f32[128,32], index: 1, kind: input, shape index: {}]
  %s2 = inlined_call_operand.vmem [shape: f32[128,1], index: 2, kind: input, shape index: {}]
  %s3 = inlined_call_operand.vmem [shape: f32[1,128], index: 3, kind: input, shape index: {}]
  %s4 = inlined_call_operand.hbm [shape: f32[1,1], index: 4, kind: output, shape index: {}]
  %s5 = sld [smem:[#allocation0]]
  $region34: #{tpu_custom_call.1} parent=0
    _
  %s7 = ssub.s32 1, %s5
  %s8 = scalar_select 0, %s7, %s5
  $region1: #{tpu_custom_call.1} parent=0
    #allocation3 [shape = 'u8[512]{0}', space=smem, size = 0x200, scoped, tag = 'output window, operand 0, single buffered']
    #allocation4 [shape = 's32[1]{0}', space=sflag, size = 0x4, scoped, tag = 'scoped memory for tpu_custom_call.1']
    %9 = vsyncpa [#allocation4], 0
    // Predicated region
    $region2: #{tpu_custom_call.1} parent=1 // pred_check
      _
    $region3: #{tpu_custom_call.1} parent=1 // pred_check_branch
      %11 = sbr.rel (0) target = $region5
    $region4: #{tpu_custom_call.1} parent=1 // pred_region
      _
    $region5: #{tpu_custom_call.1} parent=1 // pred_fallthru
      _
    // Predicated region
    $region6: #{tpu_custom_call.1} parent=1 // pred_check
      _
    $region7: #{tpu_custom_call.1} parent=1 // pred_check_branch
      %13 = sbr.rel (0) target = $region9
    $region8: #{tpu_custom_call.1} parent=1 // pred_region
      _
    $region9: #{tpu_custom_call.1} parent=1 // pred_fallthru
      _
    // Predicated region
    $region10: #{tpu_custom_call.1} parent=1 // pred_check
      _
    $region11: #{tpu_custom_call.1} parent=1 // pred_check_branch
      %15 = sbr.rel (0) target = $region13
    $region12: #{tpu_custom_call.1} parent=1 // pred_region
      _
    $region13: #{tpu_custom_call.1} parent=1 // pred_fallthru
      _
    // Predicated region
    $region14: #{tpu_custom_call.1} parent=1 // pred_check
      _
    $region15: #{tpu_custom_call.1} parent=1 // pred_check_branch
      %17 = sbr.rel (0) target = $region17
    $region16: #{tpu_custom_call.1} parent=1 // pred_region
      _
    $region17: #{tpu_custom_call.1} parent=1 // pred_fallthru
      _
    %v18 = vld [vmem:[%s0] sm:$0xff]
    %v19 = vld [vmem:[%s0 + $0x8] sm:$0xff]
    %v20 = vld [vmem:[%s0 + $0x10] sm:$0xff]
    %v21 = vld [vmem:[%s0 + $0x18] sm:$0xff]
    %v22 = vld [vmem:[%s0 + $0x20] sm:$0xff]
    %v23 = vld [vmem:[%s0 + $0x28] sm:$0xff]
    %v24 = vld [vmem:[%s0 + $0x30] sm:$0xff]
    %v25 = vld [vmem:[%s0 + $0x38] sm:$0xff]
    %v26 = vld [vmem:[%s0 + $0x40] sm:$0xff]
    %v27 = vld [vmem:[%s0 + $0x48] sm:$0xff]
    %v28 = vld [vmem:[%s0 + $0x50] sm:$0xff]
    %v29 = vld [vmem:[%s0 + $0x58] sm:$0xff]
    %v30 = vld [vmem:[%s0 + $0x60] sm:$0xff]
    %v31 = vld [vmem:[%s0 + $0x68] sm:$0xff]
    %v32 = vld [vmem:[%s0 + $0x70] sm:$0xff]
    %v33 = vld [vmem:[%s0 + $0x78] sm:$0xff]
    %v34 = vld [vmem:[%s1] sm:$0xff]
    %v35 = vld [vmem:[%s1 + $0x8] sm:$0xff]
    %v36 = vld [vmem:[%s1 + $0x10] sm:$0xff]
    %v37 = vld [vmem:[%s1 + $0x18] sm:$0xff]
    %v38 = vld [vmem:[%s1 + $0x20] sm:$0xff]
    %v39 = vld [vmem:[%s1 + $0x28] sm:$0xff]
    %v40 = vld [vmem:[%s1 + $0x30] sm:$0xff]
    %v41 = vld [vmem:[%s1 + $0x38] sm:$0xff]
    %v42 = vld [vmem:[%s1 + $0x40] sm:$0xff]
    %v43 = vld [vmem:[%s1 + $0x48] sm:$0xff]
    %v44 = vld [vmem:[%s1 + $0x50] sm:$0xff]
    %v45 = vld [vmem:[%s1 + $0x58] sm:$0xff]
    %v46 = vld [vmem:[%s1 + $0x60] sm:$0xff]
    %v47 = vld [vmem:[%s1 + $0x68] sm:$0xff]
    %v48 = vld [vmem:[%s1 + $0x70] sm:$0xff]
    %v49 = vld [vmem:[%s1 + $0x78] sm:$0xff]
    %vm50 = vcmask 261120
    %v52 = vsel %vm50, %v18, 0
    %v55 = vsel %vm50, %v19, 0
    %v58 = vsel %vm50, %v20, 0
    %v61 = vsel %vm50, %v21, 0
    %v64 = vsel %vm50, %v22, 0
    %v67 = vsel %vm50, %v23, 0
    %v70 = vsel %vm50, %v24, 0
    %v73 = vsel %vm50, %v25, 0
    %v76 = vsel %vm50, %v26, 0
    %v79 = vsel %vm50, %v27, 0
    %v82 = vsel %vm50, %v28, 0
    %v85 = vsel %vm50, %v29, 0
    %v88 = vsel %vm50, %v30, 0
    %v91 = vsel %vm50, %v31, 0
    %v94 = vsel %vm50, %v32, 0
    %v97 = vsel %vm50, %v33, 0
    %v100 = vsel %vm50, %v34, 0
    %v103 = vsel %vm50, %v35, 0
    %v106 = vsel %vm50, %v36, 0
    %v109 = vsel %vm50, %v37, 0
    %v112 = vsel %vm50, %v38, 0
    %v115 = vsel %vm50, %v39, 0
    %v118 = vsel %vm50, %v40, 0
    %v121 = vsel %vm50, %v41, 0
    %v124 = vsel %vm50, %v42, 0
    %v127 = vsel %vm50, %v43, 0
    %v130 = vsel %vm50, %v44, 0
    %v133 = vsel %vm50, %v45, 0
    %v136 = vsel %vm50, %v46, 0
    %v139 = vsel %vm50, %v47, 0
    %v142 = vsel %vm50, %v48, 0
    %v145 = vsel %vm50, %v49, 0
    %147 = vmatpush.xpose.msra.mxu0 %v145
    %148 = vmatpush.xpose.msra.mxu0 %v142
    %149 = vmatpush.xpose.msra.mxu0 %v139
    %150 = vmatpush.xpose.msra.mxu0 %v136
    %151 = vmatpush.xpose.msra.mxu0 %v133
    %152 = vmatpush.xpose.msra.mxu0 %v130
    %153 = vmatpush.xpose.msra.mxu0 %v127
    %154 = vmatpush.xpose.msra.mxu0 %v124
    %155 = vmatpush.xpose.msra.mxu0 %v121
    %156 = vmatpush.xpose.msra.mxu0 %v118
    %157 = vmatpush.xpose.msra.mxu0 %v115
    %158 = vmatpush.xpose.msra.mxu0 %v112
    %159 = vmatpush.xpose.msra.mxu0 %v109
    %160 = vmatpush.xpose.msra.mxu0 %v106
    %161 = vmatpush.xpose.msra.mxu0 %v103
    %162 = vmatpush.xpose.msra.mxu0 %v100
    %163 = vmatmul.f32.gmra.mxu0 %v52
    %v164 = vpop.f32.mrf.mxu0
    %v165 = vadd.f32 0.0, %v164
    %166 = vmatmul.f32.gmra.mxu0 %v55
    %v167 = vpop.f32.mrf.mxu0
    %v168 = vadd.f32 0.0, %v167
    %169 = vmatmul.f32.gmra.mxu0 %v58
    %v170 = vpop.f32.mrf.mxu0
    %v171 = vadd.f32 0.0, %v170
    %172 = vmatmul.f32.gmra.mxu0 %v61
    %v173 = vpop.f32.mrf.mxu0
    %v174 = vadd.f32 0.0, %v173
    %175 = vmatmul.f32.gmra.mxu0 %v64
    %v176 = vpop.f32.mrf.mxu0
    %v177 = vadd.f32 0.0, %v176
    %178 = vmatmul.f32.gmra.mxu0 %v67
    %v179 = vpop.f32.mrf.mxu0
    %v180 = vadd.f32 0.0, %v179
    %181 = vmatmul.f32.gmra.mxu0 %v70
    %v182 = vpop.f32.mrf.mxu0
    %v183 = vadd.f32 0.0, %v182
    %184 = vmatmul.f32.gmra.mxu0 %v73
    %v185 = vpop.f32.mrf.mxu0
    %v186 = vadd.f32 0.0, %v185
    %187 = vmatmul.f32.gmra.mxu0 %v76
    %v188 = vpop.f32.mrf.mxu0
    %v189 = vadd.f32 0.0, %v188
    %190 = vmatmul.f32.gmra.mxu0 %v79
    %v191 = vpop.f32.mrf.mxu0
    %v192 = vadd.f32 0.0, %v191
    %193 = vmatmul.f32.gmra.mxu0 %v82
    %v194 = vpop.f32.mrf.mxu0
    %v195 = vadd.f32 0.0, %v194
    %196 = vmatmul.f32.gmra.mxu0 %v85
    %v197 = vpop.f32.mrf.mxu0
    %v198 = vadd.f32 0.0, %v197
    %199 = vmatmul.f32.gmra.mxu0 %v88
    %v200 = vpop.f32.mrf.mxu0
    %v201 = vadd.f32 0.0, %v200
    %202 = vmatmul.f32.gmra.mxu0 %v91
    %v203 = vpop.f32.mrf.mxu0
    %v204 = vadd.f32 0.0, %v203
    %205 = vmatmul.f32.gmra.mxu0 %v94
    %v206 = vpop.f32.mrf.mxu0
    %v207 = vadd.f32 0.0, %v206
    %208 = vmatmul.f32.gmra.mxu0 %v97
    %v209 = vpop.f32.mrf.mxu0
    %v210 = vadd.f32 0.0, %v209
    %211 = vdwg.mxu0
    %v212 = vld [vmem:[%s2] sm:$0xff]
    %v213 = vld [vmem:[%s2 + $0x8] sm:$0xff]
    %v214 = vld [vmem:[%s2 + $0x10] sm:$0xff]
    %v215 = vld [vmem:[%s2 + $0x18] sm:$0xff]
    %v216 = vld [vmem:[%s2 + $0x20] sm:$0xff]
    %v217 = vld [vmem:[%s2 + $0x28] sm:$0xff]
    %v218 = vld [vmem:[%s2 + $0x30] sm:$0xff]
    %v219 = vld [vmem:[%s2 + $0x38] sm:$0xff]
    %v220 = vld [vmem:[%s2 + $0x40] sm:$0xff]
    %v221 = vld [vmem:[%s2 + $0x48] sm:$0xff]
    %v222 = vld [vmem:[%s2 + $0x50] sm:$0xff]
    %v223 = vld [vmem:[%s2 + $0x58] sm:$0xff]
    %v224 = vld [vmem:[%s2 + $0x60] sm:$0xff]
    %v225 = vld [vmem:[%s2 + $0x68] sm:$0xff]
    %v226 = vld [vmem:[%s2 + $0x70] sm:$0xff]
    %v227 = vld [vmem:[%s2 + $0x78] sm:$0xff]
    %v228 = vld [vmem:[%s3] sm:$0x1]
    %230 = vset.pattern.permute.xlu0 0
    %231 = vperm.xlu0 %230, %v212
    %v232 = vpop.permute.xlu0 %231
    %235 = vset.pattern.permute.xlu0 0
    %236 = vperm.xlu0 %235, %v213
    %v237 = vpop.permute.xlu0 %236
    %240 = vset.pattern.permute.xlu0 0
    %241 = vperm.xlu0 %240, %v214
    %v242 = vpop.permute.xlu0 %241
    %245 = vset.pattern.permute.xlu0 0
    %246 = vperm.xlu0 %245, %v215
    %v247 = vpop.permute.xlu0 %246
    %250 = vset.pattern.permute.xlu0 0
    %251 = vperm.xlu0 %250, %v216
    %v252 = vpop.permute.xlu0 %251
    %255 = vset.pattern.permute.xlu0 0
    %256 = vperm.xlu0 %255, %v217
    %v257 = vpop.permute.xlu0 %256
    %260 = vset.pattern.permute.xlu0 0
    %261 = vperm.xlu0 %260, %v218
    %v262 = vpop.permute.xlu0 %261
    %265 = vset.pattern.permute.xlu0 0
    %266 = vperm.xlu0 %265, %v219
    %v267 = vpop.permute.xlu0 %266
    %270 = vset.pattern.permute.xlu0 0
    %271 = vperm.xlu0 %270, %v220
    %v272 = vpop.permute.xlu0 %271
    %275 = vset.pattern.permute.xlu0 0
    %276 = vperm.xlu0 %275, %v221
    %v277 = vpop.permute.xlu0 %276
    %280 = vset.pattern.permute.xlu0 0
    %281 = vperm.xlu0 %280, %v222
    %v282 = vpop.permute.xlu0 %281
    %285 = vset.pattern.permute.xlu0 0
    %286 = vperm.xlu0 %285, %v223
    %v287 = vpop.permute.xlu0 %286
    %290 = vset.pattern.permute.xlu0 0
    %291 = vperm.xlu0 %290, %v224
    %v292 = vpop.permute.xlu0 %291
    %295 = vset.pattern.permute.xlu0 0
    %296 = vperm.xlu0 %295, %v225
    %v297 = vpop.permute.xlu0 %296
    %300 = vset.pattern.permute.xlu0 0
    %301 = vperm.xlu0 %300, %v226
    %v302 = vpop.permute.xlu0 %301
    %305 = vset.pattern.permute.xlu0 0
    %306 = vperm.xlu0 %305, %v227
    %v307 = vpop.permute.xlu0 %306
    %v309 = vsub.f32 %v165, %v232
    %v310 = vsub.f32 %v168, %v237
    %v311 = vsub.f32 %v171, %v242
    %v312 = vsub.f32 %v174, %v247
    %v313 = vsub.f32 %v177, %v252
    %v314 = vsub.f32 %v180, %v257
    %v315 = vsub.f32 %v183, %v262
    %v316 = vsub.f32 %v186, %v267
    %v317 = vsub.f32 %v189, %v272
    %v318 = vsub.f32 %v192, %v277
    %v319 = vsub.f32 %v195, %v282
    %v320 = vsub.f32 %v198, %v287
    %v321 = vsub.f32 %v201, %v292
    %v322 = vsub.f32 %v204, %v297
    %v323 = vsub.f32 %v207, %v302
    %v324 = vsub.f32 %v210, %v307
    %v325 = vmax.f32 %v309, 0.0
    %v326 = vmax.f32 %v310, 0.0
    %v327 = vmax.f32 %v311, 0.0
    %v328 = vmax.f32 %v312, 0.0
    %v329 = vmax.f32 %v313, 0.0
    %v330 = vmax.f32 %v314, 0.0
    %v331 = vmax.f32 %v315, 0.0
    %v332 = vmax.f32 %v316, 0.0
    %v333 = vmax.f32 %v317, 0.0
    %v334 = vmax.f32 %v318, 0.0
    %v335 = vmax.f32 %v319, 0.0
    %v336 = vmax.f32 %v320, 0.0
    %v337 = vmax.f32 %v321, 0.0
    %v338 = vmax.f32 %v322, 0.0
    %v339 = vmax.f32 %v323, 0.0
    %v340 = vmax.f32 %v324, 0.0
    %v342 = vperm.slane %v228, 0
    %v344 = vsub.f32 %v165, %v342
    %v345 = vsub.f32 %v168, %v342
    %v346 = vsub.f32 %v171, %v342
    %v347 = vsub.f32 %v174, %v342
    %v348 = vsub.f32 %v177, %v342
    %v349 = vsub.f32 %v180, %v342
    %v350 = vsub.f32 %v183, %v342
    %v351 = vsub.f32 %v186, %v342
    %v352 = vsub.f32 %v189, %v342
    %v353 = vsub.f32 %v192, %v342
    %v354 = vsub.f32 %v195, %v342
    %v355 = vsub.f32 %v198, %v342
    %v356 = vsub.f32 %v201, %v342
    %v357 = vsub.f32 %v204, %v342
    %v358 = vsub.f32 %v207, %v342
    %v359 = vsub.f32 %v210, %v342
    %v360 = vmax.f32 %v344, 0.0
    %v361 = vmax.f32 %v345, 0.0
    %v362 = vmax.f32 %v346, 0.0
    %v363 = vmax.f32 %v347, 0.0
    %v364 = vmax.f32 %v348, 0.0
    %v365 = vmax.f32 %v349, 0.0
    %v366 = vmax.f32 %v350, 0.0
    %v367 = vmax.f32 %v351, 0.0
    %v368 = vmax.f32 %v352, 0.0
    %v369 = vmax.f32 %v353, 0.0
    %v370 = vmax.f32 %v354, 0.0
    %v371 = vmax.f32 %v355, 0.0
    %v372 = vmax.f32 %v356, 0.0
    %v373 = vmax.f32 %v357, 0.0
    %v374 = vmax.f32 %v358, 0.0
    %v375 = vmax.f32 %v359, 0.0
    %v376 = vadd.f32 %v325, %v360
    %v377 = vadd.f32 %v326, %v361
    %v378 = vadd.f32 %v327, %v362
    %v379 = vadd.f32 %v328, %v363
    %v380 = vadd.f32 %v329, %v364
    %v381 = vadd.f32 %v330, %v365
    %v382 = vadd.f32 %v331, %v366
    %v383 = vadd.f32 %v332, %v367
    %v384 = vadd.f32 %v333, %v368
    %v385 = vadd.f32 %v334, %v369
    %v386 = vadd.f32 %v335, %v370
    %v387 = vadd.f32 %v336, %v371
    %v388 = vadd.f32 %v337, %v372
    %v389 = vadd.f32 %v338, %v373
    %v390 = vadd.f32 %v339, %v374
    %v391 = vadd.f32 %v340, %v375
    %v392 = vadd.f32 %v376, %v377
    %v393 = vadd.f32 %v392, %v378
    %v394 = vadd.f32 %v393, %v379
    %v395 = vadd.f32 %v394, %v380
    %v396 = vadd.f32 %v395, %v381
    %v397 = vadd.f32 %v396, %v382
    %v398 = vadd.f32 %v397, %v383
    %v399 = vadd.f32 %v398, %v384
    %v400 = vadd.f32 %v399, %v385
    %v401 = vadd.f32 %v400, %v386
    %v402 = vadd.f32 %v401, %v387
    %v403 = vadd.f32 %v402, %v388
    %v404 = vadd.f32 %v403, %v389
    %v405 = vadd.f32 %v404, %v390
    %v406 = vadd.f32 %v405, %v391
    %v407 = vrot.slane %v406, 4
    %v408 = vadd.f32 %v406, %v407
    %v409 = vrot.slane %v408, 2
    %v410 = vadd.f32 %v408, %v409
    %v411 = vrot.slane %v410, 1
    %v412 = vadd.f32 %v410, %v411
    %p413 = scmp.eq.s32.totalorder 0, 0
    // Predicated region
    $region18: #{tpu_custom_call.1} parent=1 // pred_check
      %p414 = pneg %p413
    $region19: #{tpu_custom_call.1} parent=1 // pred_check_branch
      %416 = sbr.rel (%p414) target = $region21
    $region20: #{tpu_custom_call.1} parent=1 // pred_region
      %417 = vst [vmem:[#allocation2] sm:$0x1] 0.0
    $region21: #{tpu_custom_call.1} parent=1 // pred_fallthru
      _
    %v418 = vld [vmem:[#allocation2] sm:$0x1]
    %v419 = vadd.f32 %v418, %v412
    %420 = vst [vmem:[#allocation2] sm:$0x1] %v419
    // Predicated region
    $region22: #{tpu_custom_call.1} parent=1 // pred_check
      %p421 = pneg %p413
    $region23: #{tpu_custom_call.1} parent=1 // pred_check_branch
      %423 = sbr.rel (%p421) target = $region25
    $region24: #{tpu_custom_call.1} parent=1 // pred_region
      %v424 = vld [vmem:[#allocation2] sm:$0x1]
      %vm425 = vcmask 1040384
      %v426 = vsel %vm425, %v424, 0.0
      %427 = vadd.xlane.f32.xlu0 %v426
      %v428 = vpop.xlane.xlu0 %427
      %v429 = vrot.slane %v428, 4
      %v430 = vadd.f32 %v428, %v429
      %v431 = vrot.slane %v430, 2
      %v432 = vadd.f32 %v430, %v431
      %v433 = vrot.slane %v432, 1
      %v434 = vadd.f32 %v432, %v433
      %s435 = vtos %v434
      %s436 = scalar_lea.smem [#allocation3], 0
      %437 = sst [smem:[%s436]] %s435
    $region25: #{tpu_custom_call.1} parent=1 // pred_fallthru
      _
    // Predicated region
    $region26: #{tpu_custom_call.1} parent=1 // pred_check
      _
    $region27: #{tpu_custom_call.1} parent=1 // pred_check_branch
      %439 = sbr.rel (0) target = $region29
    $region28: #{tpu_custom_call.1} parent=1 // pred_region
      %441 = vsyncadd [#allocation4], 0
      %s443 = sshll.u32 %s4, 4
      %s444 = int_to_ptr.hbm [resolvable:$true] %s443
      %446 = dma.smem_to_hbm [#allocation3], 16, %s444, [#allocation4]
    $region29: #{tpu_custom_call.1} parent=1 // pred_fallthru
      _
    // Predicated region
    $region30: #{tpu_custom_call.1} parent=1 // pred_check
      _
    $region31: #{tpu_custom_call.1} parent=1 // pred_check_branch
      %448 = sbr.rel (0) target = $region33
    $region32: #{tpu_custom_call.1} parent=1 // pred_region
      %450 = dma.done [#allocation4], 16
    $region33: #{tpu_custom_call.1} parent=1 // pred_fallthru
      _
    %451 = sfence
    %452 = vsyncpa [#allocation4], 1

</llo_original>
